<compile_context>
chip_gen: v7x
topology: tpu7x:2x2x1
jax: 0.10.0
libtpu: 0.0.40
codegen_flags: <defaults>
</compile_context>

<pallas_src>
import jax
import jax.numpy as jnp
from jax.experimental import pallas as pl
from jax.experimental.pallas import tpu as pltpu

BN_EPS = 1e-5


# ----------------------------------------------------------------------------
# Pallas kernel: per-pixel attention gate (channel-major tiles)
#   pre = Wg(C,Fg) @ gate(Fg,TM) + Wx(C,Fl) @ skip(Fl,TM) + b      (folded BN)
#   a   = relu(pre)
#   psi = sigmoid( wp(1,C) @ a + bp )                              (folded BN)
#   out = skip * psi
# ----------------------------------------------------------------------------
def attention_kernel(gate_ref, skip_ref, wg_ref, wx_ref, b_ref, wp_ref, bp_ref,
                     out_ref):
    # TODO(synk): on v7x, if a profile shows the MRF-pop/VALU add binding,
    # drive the MXU explicitly (matmul_push_rhs/acc_lhs/pop) so both
    # projections accumulate into one MRB address; for typical attention-gate
    # shapes the kernel is HBM-bound so this is left as two jnp.dot calls.
    pre = (jnp.dot(wg_ref[...], gate_ref[...],
                   preferred_element_type=jnp.float32)
           + jnp.dot(wx_ref[...], skip_ref[...],
                     preferred_element_type=jnp.float32)
           + b_ref[...])                                       # (C, TM) f32
    a = jnp.maximum(pre, 0.0)                                  # ReLU

    # psi projection: operands in the I/O dtype (bf16 in production -> single
    # MXU pass), f32 accumulation, f32 sigmoid.
    logits = jnp.dot(wp_ref[...], a.astype(wp_ref.dtype),
                     preferred_element_type=jnp.float32) + bp_ref[0, 0]
    psi = jax.nn.sigmoid(logits)                               # (1, TM) f32

    # Final multiply in the I/O dtype: only the (1,TM) psi row gets cast.
    skip = skip_ref[...]
    out_ref[...] = skip * psi.astype(skip.dtype)


def _pick_tile(B, HW, Fg, Fl, itemsize, tile_budget_bytes):
    """VMEM-budget-driven lane-tile size (multiple of 128)."""
    per_lane = 2 * (Fg + 2 * Fl) * itemsize       # double-buffered gate+skip+out
    tm = (tile_budget_bytes // per_lane) // 128 * 128
    tm = max(512, min(int(tm), 4096))             # 512..2048 already ~roofline
    tm = min(tm, pl.cdiv(HW, 128) * 128)          # don't exceed the pixel count
    # Megacore-aware grid length: give the (parallel) grid >= 4 steps so both
    # v7x TensorCores get work and DMA prefetch overlap exists.
    while B * pl.cdiv(HW, tm) < 4 and tm > 128:
        tm = max(128, (tm // 2) // 128 * 128)
    return tm


def attention_block_pallas(gate, skip, folded):
    """gate: [B, F_g, H, W], skip: [B, F_l, H, W] -> [B, F_l, H, W]."""
    assert gate.dtype == skip.dtype
    B, Fg, H, W = gate.shape
    _, Fl, _, _ = skip.shape
    C = folded["wg"].shape[0]
    HW = H * W
    itemsize = jnp.dtype(skip.dtype).itemsize

    # Free reshape: NCHW kept, spatial axes merged.
    gate3 = gate.reshape(B, Fg, HW)
    skip3 = skip.reshape(B, Fl, HW)

    # Generation-aware VMEM budget (v7x: 64 MiB/TC -> ~48 MiB of tiles;
    # v5e/v6e: 128 MiB -> up to ~96 MiB of tiles).
    try:
        vmem_cap = int(pltpu.get_tpu_info().vmem_capacity_bytes)
    except Exception:
        vmem_cap = 128 * 1024 * 1024
    tile_budget = min((vmem_cap * 3) // 4, 96 * 1024 * 1024)

    tm = _pick_tile(B, HW, Fg, Fl, itemsize, tile_budget)
    n_tiles = pl.cdiv(HW, tm)   # partial final block handled by Pallas masking

    # Projection weights ride in the I/O dtype (bf16 inputs -> bf16 MXU
    # passes); biases and the psi/sigmoid path stay f32.
    wg = folded["wg"].astype(gate.dtype)     # (C, Fg)
    wx = folded["wx"].astype(skip.dtype)     # (C, Fl)
    b = folded["b"]                          # (C, 1) f32, bg+bx pre-summed
    wp = folded["wp"].astype(gate.dtype)     # (1, C)
    bp = folded["bp"]                        # (1, 1) f32 -> SMEM scalar

    # VMEM limit: actual tile + weight footprint plus headroom, never above
    # physical capacity (raised well past 32 MiB on v5e/v6e for big channels).
    tile_bytes = 2 * tm * (Fg + 2 * Fl) * itemsize
    weight_bytes = (C * (Fg + Fl)) * itemsize + (2 * C + 2) * 4
    vmem_limit = int(min(vmem_cap,
                         max(32 * 1024 * 1024,
                             tile_bytes + weight_bytes + 16 * 1024 * 1024)))

    out3 = pl.pallas_call(
        attention_kernel,
        out_shape=jax.ShapeDtypeStruct((B, Fl, HW), skip.dtype),
        grid_spec=pltpu.PrefetchScalarGridSpec(
            num_scalar_prefetch=0,
            grid=(B, n_tiles),
            in_specs=[
                pl.BlockSpec((None, Fg, tm), lambda bb, i: (bb, 0, i)),  # gate
                pl.BlockSpec((None, Fl, tm), lambda bb, i: (bb, 0, i)),  # skip
                pl.BlockSpec((C, Fg), lambda bb, i: (0, 0)),             # Wg
                pl.BlockSpec((C, Fl), lambda bb, i: (0, 0)),             # Wx
                pl.BlockSpec((C, 1), lambda bb, i: (0, 0)),              # b
                pl.BlockSpec((1, C), lambda bb, i: (0, 0)),              # wp
                pl.BlockSpec(memory_space=pltpu.MemorySpace.SMEM),       # bp
            ],
            out_specs=pl.BlockSpec((None, Fl, tm), lambda bb, i: (bb, 0, i)),
        ),
        compiler_params=pltpu.CompilerParams(
            dimension_semantics=("parallel", "parallel"),
            vmem_limit_bytes=vmem_limit),
    )(gate3, skip3, wg, wx, b, wp, bp)

    return out3.reshape(B, Fl, H, W)


# ----------------------------------------------------------------------------
# Parameter construction (deterministic) and Conv1x1+BatchNorm folding
# ----------------------------------------------------------------------------
def fold_conv_bn(conv_w, conv_b, gamma, beta, mean, var):
    """conv_w: (C_out, C_in) 1x1 conv.  Returns folded (W', b') so that
    y = W' @ x + b' matches Conv2d+BatchNorm2d (eval) per pixel."""
    scale = gamma / jnp.sqrt(var + BN_EPS)              # (C_out,)
    w_folded = conv_w * scale[:, None]                  # (C_out, C_in)
    b_folded = (conv_b - mean) * scale + beta           # (C_out,)
    return w_folded, b_folded


def make_params(key, F_g, F_l, n_coeff):
    ks = jax.random.split(key, 12)
    p = {
        # W_gate: Conv2d(F_g, n_coeff, 1) + BN(n_coeff)
        "wg_conv": jax.random.normal(ks[0], (n_coeff, F_g), jnp.float32) * 0.2,
        "bg_conv": jax.random.normal(ks[1], (n_coeff,), jnp.float32) * 0.1,
        "g_gamma": 1.0 + 0.1 * jax.random.normal(ks[2], (n_coeff,), jnp.float32),
        "g_beta": 0.1 * jax.random.normal(ks[3], (n_coeff,), jnp.float32),
        "g_mean": 0.05 * jax.random.normal(ks[4], (n_coeff,), jnp.float32),
        "g_var": 0.5 + jnp.abs(jax.random.normal(ks[5], (n_coeff,), jnp.float32)),
        # W_x: Conv2d(F_l, n_coeff, 1) + BN(n_coeff)
        "wx_conv": jax.random.normal(ks[6], (n_coeff, F_l), jnp.float32) * 0.2,
        "bx_conv": jax.random.normal(ks[7], (n_coeff,), jnp.float32) * 0.1,
        "x_gamma": 1.0 + 0.1 * jax.random.normal(ks[8], (n_coeff,), jnp.float32),
        "x_beta": 0.1 * jax.random.normal(ks[9], (n_coeff,), jnp.float32),
        "x_mean": 0.05 * jax.random.normal(ks[10], (n_coeff,), jnp.float32),
        "x_var": 0.5 + jnp.abs(jax.random.normal(ks[11], (n_coeff,), jnp.float32)),
    }
    kp = jax.random.split(jax.random.fold_in(key, 123), 6)
    p.update({
        # psi: Conv2d(n_coeff, 1, 1) + BN(1) + Sigmoid
        "wp_conv": jax.random.normal(kp[0], (1, n_coeff), jnp.float32) * 0.2,
        "bp_conv": jax.random.normal(kp[1], (1,), jnp.float32) * 0.1,
        "p_gamma": 1.0 + 0.1 * jax.random.normal(kp[2], (1,), jnp.float32),
        "p_beta": 0.1 * jax.random.normal(kp[3], (1,), jnp.float32),
        "p_mean": 0.05 * jax.random.normal(kp[4], (1,), jnp.float32),
        "p_var": 0.5 + jnp.abs(jax.random.normal(kp[5], (1,), jnp.float32)),
    })
    return p


def fold_params(p):
    wg, bg = fold_conv_bn(p["wg_conv"], p["bg_conv"], p["g_gamma"], p["g_beta"],
                          p["g_mean"], p["g_var"])
    wx, bx = fold_conv_bn(p["wx_conv"], p["bx_conv"], p["x_gamma"], p["x_beta"],
                          p["x_mean"], p["x_var"])
    wp, bp = fold_conv_bn(p["wp_conv"], p["bp_conv"], p["p_gamma"], p["p_beta"],
                          p["p_mean"], p["p_var"])
    return {
        "wg": wg,                                  # (C, F_g)
        "wx": wx,                                  # (C, F_l)
        "b": (bg + bx)[:, None],                   # (C, 1)  biases pre-summed
        "wp": wp,                                  # (1, C)
        "bp": bp[None, :].astype(jnp.float32),     # (1, 1)
    }


# Pure-JAX reference (same math, NCHW) used only for correctness checks.
# TODO(synk): BatchNorm is implemented with eval-mode (running-stat) semantics;
# PyTorch training-mode batch statistics are not reproduced.
def ref_forward(gate, skip, folded):
    g1 = jnp.einsum("bchw,dc->bdhw", gate, folded["wg"])
    x1 = jnp.einsum("bchw,dc->bdhw", skip, folded["wx"])
    a = jnp.maximum(g1 + x1 + folded["b"][:, 0][None, :, None, None], 0.0)
    logits = jnp.einsum("bchw,c->bhw", a, folded["wp"][0]) + folded["bp"][0, 0]
    psi = jax.nn.sigmoid(logits)[:, None, :, :]
    return skip * psi


if __name__ == "__main__":
    B, F_g, F_l, n_coeff, H, W = 2, 4, 4, 8, 16, 16
    key = jax.random.PRNGKey(0)
    k_gate, k_skip, k_par = jax.random.split(key, 3)

    gate = jax.random.normal(k_gate, (B, F_g, H, W), jnp.float32)
    skip = jax.random.normal(k_skip, (B, F_l, H, W), jnp.float32)

    params = make_params(k_par, F_g, F_l, n_coeff)
    folded = fold_params(params)

    ref = ref_forward(gate, skip, folded)

    # f32 I/O path (tight tolerance)
    out = jax.block_until_ready(attention_block_pallas(gate, skip, folded))
    assert out.shape == (B, F_l, H, W)
    assert jnp.allclose(out, ref, atol=1e-4, rtol=1e-4), "f32 mismatch vs reference"

    # bf16 I/O path (production default: halves HBM traffic; psi math stays f32)
    out_bf16 = jax.block_until_ready(
        attention_block_pallas(gate.astype(jnp.bfloat16),
                               skip.astype(jnp.bfloat16), folded))
    assert out_bf16.dtype == jnp.bfloat16
    assert jnp.allclose(out_bf16.astype(jnp.float32), ref, atol=1e-1, rtol=1e-1), \
        "bf16 mismatch vs reference"

    # Non-tile-divisible spatial size: exercises the masked partial final block
    # (no jnp.pad / slice HBM passes anymore).
    H2, W2 = 16, 10
    gate2 = jax.random.normal(jax.random.fold_in(key, 7), (B, F_g, H2, W2),
                              jnp.float32)
    skip2 = jax.random.normal(jax.random.fold_in(key, 8), (B, F_l, H2, W2),
                              jnp.float32)
    ref2 = ref_forward(gate2, skip2, folded)
    out2 = jax.block_until_ready(attention_block_pallas(gate2, skip2, folded))
    assert out2.shape == (B, F_l, H2, W2)
    assert bool(jnp.isfinite(out2).all()), "non-divisible path produced non-finite values"
    assert jnp.allclose(out2, ref2, atol=1e-4, rtol=1e-4), \
        "non-divisible-HW mismatch vs reference"

    print("KERNEL_OK")
</pallas_src>

<mosaic_0001>
module attributes {stable_mosaic.version = 11 : i64} {
  func.func @attention_kernel(%arg0: i32, %arg1: i32, %arg2: memref<1x4x128xf32, #tpu.memory_space<vmem>>, %arg3: memref<1x4x128xf32, #tpu.memory_space<vmem>>, %arg4: memref<8x4xf32, #tpu.memory_space<vmem>>, %arg5: memref<8x4xf32, #tpu.memory_space<vmem>>, %arg6: memref<8x1xf32, #tpu.memory_space<vmem>>, %arg7: memref<1x8xf32, #tpu.memory_space<vmem>>, %arg8: memref<1x1xf32, #tpu.memory_space<smem>>, %arg9: memref<1x4x128xf32, #tpu.memory_space<vmem>>) attributes {dimension_semantics = [#tpu.dimension_semantics<parallel>, #tpu.dimension_semantics<parallel>], iteration_bounds = array<i64: 2, 2>, scalar_prefetch = 0 : i64, scratch_operands = 0 : i64, tpu.core_type = #tpu.core_type<tc>, window_params = [{transform_indices = @transform_0, window_bounds = array<i64: 1, 4, 128>}, {transform_indices = @transform_1, window_bounds = array<i64: 1, 4, 128>}, {pipeline_mode = #tpu.pipeline_mode<synchronous>, transform_indices = @transform_2, window_bounds = array<i64: 8, 4>}, {pipeline_mode = #tpu.pipeline_mode<synchronous>, transform_indices = @transform_3, window_bounds = array<i64: 8, 4>}, {pipeline_mode = #tpu.pipeline_mode<synchronous>, transform_indices = @transform_4, window_bounds = array<i64: 8, 1>}, {pipeline_mode = #tpu.pipeline_mode<synchronous>, transform_indices = @transform_5, window_bounds = array<i64: 1, 8>}, {transform_indices = @transform_6, window_bounds = array<i64: 1, 1>}, {transform_indices = @transform_7, window_bounds = array<i64: 1, 4, 128>}]} {
    %c0 = arith.constant 0 : index
    %c0_0 = arith.constant 0 : index
    %0 = vector.load %arg4[%c0, %c0_0] : memref<8x4xf32, #tpu.memory_space<vmem>>, vector<8x4xf32>
    %c0_1 = arith.constant 0 : index
    %c0_2 = arith.constant 0 : index
    %c0_3 = arith.constant 0 : index
    %1 = vector.load %arg2[%c0_1, %c0_2, %c0_3] : memref<1x4x128xf32, #tpu.memory_space<vmem>>, vector<1x4x128xf32>
    %2 = vector.shape_cast %1 : vector<1x4x128xf32> to vector<4x128xf32>
    %cst = arith.constant dense<0.000000e+00> : vector<8x128xf32>
    %3 = tpu.matmul %0, %2, %cst {dimension_numbers = #tpu.dot_dimension_numbers<[1], [0], [0], [1], [0, 0, 1, 1], [], []>} : vector<8x4xf32>, vector<4x128xf32>, vector<8x128xf32> -> vector<8x128xf32>
    %c0_4 = arith.constant 0 : index
    %c0_5 = arith.constant 0 : index
    %4 = vector.load %arg5[%c0_4, %c0_5] : memref<8x4xf32, #tpu.memory_space<vmem>>, vector<8x4xf32>
    %c0_6 = arith.constant 0 : index
    %c0_7 = arith.constant 0 : index
    %c0_8 = arith.constant 0 : index
    %5 = vector.load %arg3[%c0_6, %c0_7, %c0_8] : memref<1x4x128xf32, #tpu.memory_space<vmem>>, vector<1x4x128xf32>
    %6 = vector.shape_cast %5 : vector<1x4x128xf32> to vector<4x128xf32>
    %cst_9 = arith.constant dense<0.000000e+00> : vector<8x128xf32>
    %7 = tpu.matmul %4, %6, %cst_9 {dimension_numbers = #tpu.dot_dimension_numbers<[1], [0], [0], [1], [0, 0, 1, 1], [], []>} : vector<8x4xf32>, vector<4x128xf32>, vector<8x128xf32> -> vector<8x128xf32>
    %8 = arith.addf %3, %7 : vector<8x128xf32>
    %c0_10 = arith.constant 0 : index
    %c0_11 = arith.constant 0 : index
    %9 = vector.load %arg6[%c0_10, %c0_11] : memref<8x1xf32, #tpu.memory_space<vmem>>, vector<8x1xf32>
    %10 = vector.broadcast %9 : vector<8x1xf32> to vector<8x128xf32>
    %11 = arith.addf %8, %10 : vector<8x128xf32>
    %cst_12 = arith.constant 0.000000e+00 : f32
    %12 = vector.broadcast %cst_12 : f32 to vector<8x128xf32>
    %13 = arith.maximumf %11, %12 : vector<8x128xf32>
    %c0_13 = arith.constant 0 : index
    %c0_14 = arith.constant 0 : index
    %14 = vector.load %arg7[%c0_13, %c0_14] : memref<1x8xf32, #tpu.memory_space<vmem>>, vector<1x8xf32>
    %cst_15 = arith.constant dense<0.000000e+00> : vector<1x128xf32>
    %15 = tpu.matmul %14, %13, %cst_15 {dimension_numbers = #tpu.dot_dimension_numbers<[1], [0], [0], [1], [0, 0, 1, 1], [], []>} : vector<1x8xf32>, vector<8x128xf32>, vector<1x128xf32> -> vector<1x128xf32>
    %c0_16 = arith.constant 0 : index
    %c0_17 = arith.constant 0 : index
    %16 = memref.load %arg8[%c0_16, %c0_17] : memref<1x1xf32, #tpu.memory_space<smem>>
    %17 = vector.broadcast %16 : f32 to vector<1x128xf32>
    %18 = arith.addf %15, %17 : vector<1x128xf32>
    %19 = arith.negf %18 : vector<1x128xf32>
    %20 = math.exp %19 : vector<1x128xf32>
    %cst_18 = arith.constant 1.000000e+00 : f32
    %21 = vector.broadcast %cst_18 : f32 to vector<1x128xf32>
    %22 = arith.addf %21, %20 : vector<1x128xf32>
    %23 = arith.divf %21, %22 : vector<1x128xf32>
    %c0_19 = arith.constant 0 : index
    %c0_20 = arith.constant 0 : index
    %c0_21 = arith.constant 0 : index
    %24 = vector.load %arg3[%c0_19, %c0_20, %c0_21] : memref<1x4x128xf32, #tpu.memory_space<vmem>>, vector<1x4x128xf32>
    %25 = vector.shape_cast %24 : vector<1x4x128xf32> to vector<4x128xf32>
    %26 = vector.broadcast %23 : vector<1x128xf32> to vector<4x128xf32>
    %27 = arith.mulf %25, %26 : vector<4x128xf32>
    %c0_22 = arith.constant 0 : index
    %c0_23 = arith.constant 0 : index
    %c0_24 = arith.constant 0 : index
    %28 = vector.load %arg9[%c0_22, %c0_23, %c0_24] : memref<1x4x128xf32, #tpu.memory_space<vmem>>, vector<1x4x128xf32>
    %29 = vector.shape_cast %28 : vector<1x4x128xf32> to vector<4x128xf32>
    %30 = vector.shape_cast %27 : vector<4x128xf32> to vector<1x4x128xf32>
    tpu.vector_store %arg9[%c0_22, %c0_23, %c0_24], %30 {strides = array<i32>} : memref<1x4x128xf32, #tpu.memory_space<vmem>>, vector<1x4x128xf32>,
    return
  }
  func.func @transform_0(%arg0: i32, %arg1: i32) -> (i32, i32, i32) {
    %c0_i32 = arith.constant 0 : i32
    %c0_i32_0 = arith.constant 0 : i32
    return %arg0, %c0_i32, %arg1 : i32, i32, i32
  }
  func.func @transform_1(%arg0: i32, %arg1: i32) -> (i32, i32, i32) {
    %c0_i32 = arith.constant 0 : i32
    %c0_i32_0 = arith.constant 0 : i32
    return %arg0, %c0_i32, %arg1 : i32, i32, i32
  }
  func.func @transform_2(%arg0: i32, %arg1: i32) -> (i32, i32) {
    %c0_i32 = arith.constant 0 : i32
    %c0_i32_0 = arith.constant 0 : i32
    %c0_i32_1 = arith.constant 0 : i32
    return %c0_i32, %c0_i32_0 : i32, i32
  }
  func.func @transform_3(%arg0: i32, %arg1: i32) -> (i32, i32) {
    %c0_i32 = arith.constant 0 : i32
    %c0_i32_0 = arith.constant 0 : i32
    %c0_i32_1 = arith.constant 0 : i32
    return %c0_i32, %c0_i32_0 : i32, i32
  }
  func.func @transform_4(%arg0: i32, %arg1: i32) -> (i32, i32) {
    %c0_i32 = arith.constant 0 : i32
    %c0_i32_0 = arith.constant 0 : i32
    %c0_i32_1 = arith.constant 0 : i32
    return %c0_i32, %c0_i32_0 : i32, i32
  }
  func.func @transform_5(%arg0: i32, %arg1: i32) -> (i32, i32) {
    %c0_i32 = arith.constant 0 : i32
    %c0_i32_0 = arith.constant 0 : i32
    %c0_i32_1 = arith.constant 0 : i32
    return %c0_i32, %c0_i32_0 : i32, i32
  }
  func.func @transform_6(%arg0: i32, %arg1: i32) -> (i32, i32) {
    %c0_i32 = arith.constant 0 : i32
    %c0_i32_0 = arith.constant 0 : i32
    %c0_i32_1 = arith.constant 0 : i32
    return %c0_i32, %c0_i32_0 : i32, i32
  }
  func.func @transform_7(%arg0: i32, %arg1: i32) -> (i32, i32, i32) {
    %c0_i32 = arith.constant 0 : i32
    %c0_i32_0 = arith.constant 0 : i32
    return %arg0, %c0_i32, %arg1 : i32, i32, i32
  }
}

</mosaic_0001>

<llo_original>
// kernel: tpu_custom_call.1
$region0: #{tpu_custom_call.1}
  #allocation0 [shape = 'u32[]', space=smem, size = 0x4, offset = 0x4, fixed_abs, tag = 'smem constant byte address 0x4 - core index']
  #allocation1 [shape = 'u32[144,128]{1,0:T(1,128)}', space=vmem, size = 0x12000, scoped, tag = 'internal scratch']
  #allocation2 [shape = 'f32[1,1]{1,0:T(1,128)S(6)}', space=smem, size = 0x200, scoped, tag = 'scoped memory for tpu_custom_call.1']
  %s0 = inlined_call_operand.vmem [shape: f32[2,4,256], index: 0, kind: input, shape index: {}]
  %s1 = inlined_call_operand.vmem [shape: f32[2,4,256], index: 1, kind: input, shape index: {}]
  %s2 = inlined_call_operand.vmem [shape: f32[8,4], index: 2, kind: input, shape index: {}]
  %s3 = inlined_call_operand.vmem [shape: f32[8,4], index: 3, kind: input, shape index: {}]
  %s4 = inlined_call_operand.vmem [shape: f32[8,1], index: 4, kind: input, shape index: {}]
  %s5 = inlined_call_operand.vmem [shape: f32[1,8], index: 5, kind: input, shape index: {}]
  %s6 = inlined_call_operand.<no memory space> [shape: f32[1,1], index: 6, kind: input, shape index: {}]
  %s7 = inlined_call_operand.hbm [shape: f32[2,4,256], index: 7, kind: output, shape index: {}]
  %s8 = sld [smem:[#allocation0]]
  $region61: #{tpu_custom_call.1} parent=0
    _
  %s10 = ssub.s32 1, %s8
  %s11 = scalar_select 0, %s10, %s8
  %12 = sst [smem:[#allocation2]] %s6
  $region1: #{tpu_custom_call.1} parent=0
    #allocation3 [shape = 'u8[4096]{0}', space=vmem, size = 0x1000, scoped, tag = 'output window, operand 0']
    #allocation4 [shape = 's32[2]{0}', space=sflag, size = 0x8, scoped, tag = 'scoped memory for tpu_custom_call.1']
    %13 = vsyncpa [#allocation4], 0
    %s14 = scalar_lea.sflag [#allocation4], 1
    %15 = vsyncpa %s14, 0
    loop: start=0, step=1, limit=6
    $region2: #{tpu_custom_call.1} parent=1 // loop_pre_header
      _
    $region3: #{tpu_custom_call.1} parent=1 // loop_header
      %s17 = sphi 0, %s21
      %p18 = scmp.ge.s32.totalorder %s17, 6
      %s24 = sphi 0, %s36
      %s25 = sphi 0, %s32
      %s26 = sphi 0, %s24
      %s27 = sphi 0, %s25
      %s28 = sphi 0, %s26
      %s29 = sphi 0, %s27
      %s41 = sphi 0, %s43
      %s44 = sphi 0, %s41
      %s45 = sphi 0, %s44
      %s61 = sphi 0, %s45
      %s69 = sphi 0, %s71
      %s72 = sphi 0, %s69
      %s73 = sphi 0, %s72
      %s89 = sphi 0, %s73
      %s93 = sphi 0, %s93
      %s95 = sphi 0, %s93
      %s96 = sphi 0, %s95
      %s110 = sphi 0, %s96
      %s114 = sphi 0, %s114
      %s116 = sphi 0, %s114
      %s117 = sphi 0, %s116
      %s131 = sphi 0, %s117
      %s135 = sphi 0, %s135
      %s137 = sphi 0, %s135
      %s138 = sphi 0, %s137
      %s152 = sphi 0, %s138
      %s156 = sphi 0, %s156
      %s158 = sphi 0, %s156
      %s159 = sphi 0, %s158
      %s173 = sphi 0, %s159
      %s177 = sphi 0, %s177
      %s179 = sphi 0, %s177
      %s180 = sphi 0, %s179
      %s194 = sphi 0, %s180
      %s202 = sphi 0, %s204
      %s205 = sphi 0, %s202
      %s206 = sphi 0, %s205
      %s222 = sphi 0, %s206
    $region4: #{tpu_custom_call.1} parent=1 // loop_header_branch
      %20 = sbr.rel (%p18) target = $region8
    $region5: #{tpu_custom_call.1} parent=1 // loop_body
      %s22 = ssub.s32 %s17, 1
      %s23 = ssub.s32 %s17, 2
      %s30 = sadd.s32 1, %s25
      %p31 = scmp.ge.s32.totalorder %s30, 2
      %s32 = scalar_select %p31, 0, %s30
      %s33 = sadd.s32 1, %s24
      %s34 = scalar_select %p31, %s33, %s24
      %p35 = scmp.ge.s32.totalorder %s34, 2
      %s36 = scalar_select %p35, 0, %s34
      %s37 = ssub.s32 %s24, %s36
      %s38 = ssub.s32 %s25, %s32
      %s39 = sor.u32 %s37, %s38
      %p40 = scmp.eq.s32.totalorder %s39, 0
      %s42 = sadd.s32 %s41, 1
      %s43 = scalar_select %p40, %s41, %s42
      %p46 = pneg %p40
      %p47 = scmp.eq.s32.totalorder %s17, 3
      %p48 = por %p46, %p47
      %p49 = scmp.ne.s32.totalorder %s41, %s44
      %p50 = scmp.eq.s32.totalorder %s17, 0
      %p51 = por %p49, %p50
      %p52 = scmp.ne.s32.totalorder %s41, %s44
      %p53 = scmp.eq.s32.totalorder %s22, 3
      %p54 = por %p52, %p53
      %p55 = scmp.ne.s32.totalorder %s44, %s45
      %p56 = scmp.eq.s32.totalorder %s22, 0
      %p57 = por %p55, %p56
      %p58 = scmp.ne.s32.totalorder %s44, %s45
      %p59 = scmp.eq.s32.totalorder %s23, 3
      %p60 = por %p58, %p59
      %p62 = scmp.ne.s32.totalorder %s45, %s61
      %p63 = scmp.eq.s32.totalorder %s23, 0
      %p64 = por %p62, %p63
      %s65 = ssub.s32 %s24, %s36
      %s66 = ssub.s32 %s25, %s32
      %s67 = sor.u32 %s65, %s66
      %p68 = scmp.eq.s32.totalorder %s67, 0
      %s70 = sadd.s32 %s69, 1
      %s71 = scalar_select %p68, %s69, %s70
      %p74 = pneg %p68
      %p75 = scmp.eq.s32.totalorder %s17, 3
      %p76 = por %p74, %p75
      %p77 = scmp.ne.s32.totalorder %s69, %s72
      %p78 = scmp.eq.s32.totalorder %s17, 0
      %p79 = por %p77, %p78
      %p80 = scmp.ne.s32.totalorder %s69, %s72
      %p81 = scmp.eq.s32.totalorder %s22, 3
      %p82 = por %p80, %p81
      %p83 = scmp.ne.s32.totalorder %s72, %s73
      %p84 = scmp.eq.s32.totalorder %s22, 0
      %p85 = por %p83, %p84
      %p86 = scmp.ne.s32.totalorder %s72, %s73
      %p87 = scmp.eq.s32.totalorder %s23, 3
      %p88 = por %p86, %p87
      %p90 = scmp.ne.s32.totalorder %s73, %s89
      %p91 = scmp.eq.s32.totalorder %s23, 0
      %p92 = por %p90, %p91
      %s94 = sadd.s32 %s93, 1
      %p97 = scmp.eq.s32.totalorder %s17, 3
      %p98 = scmp.ne.s32.totalorder %s93, %s95
      %p99 = scmp.eq.s32.totalorder %s17, 0
      %p100 = por %p98, %p99
      %p101 = scmp.ne.s32.totalorder %s93, %s95
      %p102 = scmp.eq.s32.totalorder %s22, 3
      %p103 = por %p101, %p102
      %p104 = scmp.ne.s32.totalorder %s95, %s96
      %p105 = scmp.eq.s32.totalorder %s22, 0
      %p106 = por %p104, %p105
      %p107 = scmp.ne.s32.totalorder %s95, %s96
      %p108 = scmp.eq.s32.totalorder %s23, 3
      %p109 = por %p107, %p108
      %p111 = scmp.ne.s32.totalorder %s96, %s110
      %p112 = scmp.eq.s32.totalorder %s23, 0
      %p113 = por %p111, %p112
      %s115 = sadd.s32 %s114, 1
      %p118 = scmp.eq.s32.totalorder %s17, 3
      %p119 = scmp.ne.s32.totalorder %s114, %s116
      %p120 = scmp.eq.s32.totalorder %s17, 0
      %p121 = por %p119, %p120
      %p122 = scmp.ne.s32.totalorder %s114, %s116
      %p123 = scmp.eq.s32.totalorder %s22, 3
      %p124 = por %p122, %p123
      %p125 = scmp.ne.s32.totalorder %s116, %s117
      %p126 = scmp.eq.s32.totalorder %s22, 0
      %p127 = por %p125, %p126
      %p128 = scmp.ne.s32.totalorder %s116, %s117
      %p129 = scmp.eq.s32.totalorder %s23, 3
      %p130 = por %p128, %p129
      %p132 = scmp.ne.s32.totalorder %s117, %s131
      %p133 = scmp.eq.s32.totalorder %s23, 0
      %p134 = por %p132, %p133
      %s136 = sadd.s32 %s135, 1
      %p139 = scmp.eq.s32.totalorder %s17, 3
      %p140 = scmp.ne.s32.totalorder %s135, %s137
      %p141 = scmp.eq.s32.totalorder %s17, 0
      %p142 = por %p140, %p141
      %p143 = scmp.ne.s32.totalorder %s135, %s137
      %p144 = scmp.eq.s32.totalorder %s22, 3
      %p145 = por %p143, %p144
      %p146 = scmp.ne.s32.totalorder %s137, %s138
      %p147 = scmp.eq.s32.totalorder %s22, 0
      %p148 = por %p146, %p147
      %p149 = scmp.ne.s32.totalorder %s137, %s138
      %p150 = scmp.eq.s32.totalorder %s23, 3
      %p151 = por %p149, %p150
      %p153 = scmp.ne.s32.totalorder %s138, %s152
      %p154 = scmp.eq.s32.totalorder %s23, 0
      %p155 = por %p153, %p154
      %s157 = sadd.s32 %s156, 1
      %p160 = scmp.eq.s32.totalorder %s17, 3
      %p161 = scmp.ne.s32.totalorder %s156, %s158
      %p162 = scmp.eq.s32.totalorder %s17, 0
      %p163 = por %p161, %p162
      %p164 = scmp.ne.s32.totalorder %s156, %s158
      %p165 = scmp.eq.s32.totalorder %s22, 3
      %p166 = por %p164, %p165
      %p167 = scmp.ne.s32.totalorder %s158, %s159
      %p168 = scmp.eq.s32.totalorder %s22, 0
      %p169 = por %p167, %p168
      %p170 = scmp.ne.s32.totalorder %s158, %s159
      %p171 = scmp.eq.s32.totalorder %s23, 3
      %p172 = por %p170, %p171
      %p174 = scmp.ne.s32.totalorder %s159, %s173
      %p175 = scmp.eq.s32.totalorder %s23, 0
      %p176 = por %p174, %p175
      %s178 = sadd.s32 %s177, 1
      %p181 = scmp.eq.s32.totalorder %s17, 3
      %p182 = scmp.ne.s32.totalorder %s177, %s179
      %p183 = scmp.eq.s32.totalorder %s17, 0
      %p184 = por %p182, %p183
      %p185 = scmp.ne.s32.totalorder %s177, %s179
      %p186 = scmp.eq.s32.totalorder %s22, 3
      %p187 = por %p185, %p186
      %p188 = scmp.ne.s32.totalorder %s179, %s180
      %p189 = scmp.eq.s32.totalorder %s22, 0
      %p190 = por %p188, %p189
      %p191 = scmp.ne.s32.totalorder %s179, %s180
      %p192 = scmp.eq.s32.totalorder %s23, 3
      %p193 = por %p191, %p192
      %p195 = scmp.ne.s32.totalorder %s180, %s194
      %p196 = scmp.eq.s32.totalorder %s23, 0
      %p197 = por %p195, %p196
      %s198 = ssub.s32 %s24, %s36
      %s199 = ssub.s32 %s25, %s32
      %s200 = sor.u32 %s198, %s199
      %p201 = scmp.eq.s32.totalorder %s200, 0
      %s203 = sadd.s32 %s202, 1
      %s204 = scalar_select %p201, %s202, %s203
      %p207 = pneg %p201
      %p208 = scmp.eq.s32.totalorder %s17, 3
      %p209 = por %p207, %p208
      %p210 = scmp.ne.s32.totalorder %s202, %s205
      %p211 = scmp.eq.s32.totalorder %s17, 0
      %p212 = por %p210, %p211
      %p213 = scmp.ne.s32.totalorder %s202, %s205
      %p214 = scmp.eq.s32.totalorder %s22, 3
      %p215 = por %p213, %p214
      %p216 = scmp.ne.s32.totalorder %s205, %s206
      %p217 = scmp.eq.s32.totalorder %s22, 0
      %p218 = por %p216, %p217
      %p219 = scmp.ne.s32.totalorder %s205, %s206
      %p220 = scmp.eq.s32.totalorder %s23, 3
      %p221 = por %p219, %p220
      %p223 = scmp.ne.s32.totalorder %s206, %s222
      %p224 = scmp.eq.s32.totalorder %s23, 0
      %p225 = por %p223, %p224
      %p226 = scmp.le.s32.totalorder 1, %s17
      %p227 = scmp.lt.s32.totalorder %s17, 5
      %p228 = pnand %p226, %p227
      %p229 = pneg %p228
      // Predicated region
      $region9: #{tpu_custom_call.1} parent=5 // pred_check
        _
      $region10: #{tpu_custom_call.1} parent=5 // pred_check_branch
        %231 = sbr.rel (%p228) target = $region12
      $region11: #{tpu_custom_call.1} parent=5 // pred_region
        %s232 = ssub.s32 %s17, 1
        // Predicated region
        $region13: #{tpu_custom_call.1} parent=11 // pred_check
          %p233 = pneg %p106
        $region14: #{tpu_custom_call.1} parent=11 // pred_check_branch
          %235 = sbr.rel (%p233) target = $region16
        $region15: #{tpu_custom_call.1} parent=11 // pred_region
          _
        $region16: #{tpu_custom_call.1} parent=11 // pred_fallthru
          _
        // Predicated region
        $region17: #{tpu_custom_call.1} parent=11 // pred_check
          %p236 = pneg %p127
        $region18: #{tpu_custom_call.1} parent=11 // pred_check_branch
          %238 = sbr.rel (%p236) target = $region20
        $region19: #{tpu_custom_call.1} parent=11 // pred_region
          _
        $region20: #{tpu_custom_call.1} parent=11 // pred_fallthru
          _
        // Predicated region
        $region21: #{tpu_custom_call.1} parent=11 // pred_check
          %p239 = pneg %p148
        $region22: #{tpu_custom_call.1} parent=11 // pred_check_branch
          %241 = sbr.rel (%p239) target = $region24
        $region23: #{tpu_custom_call.1} parent=11 // pred_region
          _
        $region24: #{tpu_custom_call.1} parent=11 // pred_fallthru
          _
        // Predicated region
        $region25: #{tpu_custom_call.1} parent=11 // pred_check
          %p242 = pneg %p169
        $region26: #{tpu_custom_call.1} parent=11 // pred_check_branch
          %244 = sbr.rel (%p242) target = $region28
        $region27: #{tpu_custom_call.1} parent=11 // pred_region
          _
        $region28: #{tpu_custom_call.1} parent=11 // pred_fallthru
          _
        // Predicated region
        $region29: #{tpu_custom_call.1} parent=11 // pred_check
          %p245 = pneg %p190
        $region30: #{tpu_custom_call.1} parent=11 // pred_check_branch
          %247 = sbr.rel (%p245) target = $region32
        $region31: #{tpu_custom_call.1} parent=11 // pred_region
          _
        $region32: #{tpu_custom_call.1} parent=11 // pred_fallthru
          _
      $region12: #{tpu_custom_call.1} parent=5 // pred_fallthru
        _
      %p248 = scmp.lt.s32.totalorder %s17, 4
      // Predicated region
      $region33: #{tpu_custom_call.1} parent=5 // pred_check
        %p249 = pneg %p248
      $region34: #{tpu_custom_call.1} parent=5 // pred_check_branch
        %251 = sbr.rel (%p249) target = $region36
      $region35: #{tpu_custom_call.1} parent=5 // pred_region
        // Predicated region
        $region37: #{tpu_custom_call.1} parent=35 // pred_check
          %p252 = pneg %p51
        $region38: #{tpu_custom_call.1} parent=35 // pred_check_branch
          %254 = sbr.rel (%p252) target = $region40
        $region39: #{tpu_custom_call.1} parent=35 // pred_region
          %p255 = scmp.lt.s32.totalorder %s24, 1
          %s256 = scalar_select %p255, %s24, 1
          %p257 = scmp.lt.s32.totalorder %s25, 1
          %s258 = scalar_select %p257, %s25, 1
          %s259 = smul.addr %s256, 2
          %s260 = sadd.s32 %s258, %s259
          %s261 = smul.addr %s260, 4
          %s262 = scalar_lea.vmem %s0, %s261
        $region40: #{tpu_custom_call.1} parent=35 // pred_fallthru
          _
        // Predicated region
        $region41: #{tpu_custom_call.1} parent=35 // pred_check
          %p263 = pneg %p79
        $region42: #{tpu_custom_call.1} parent=35 // pred_check_branch
          %265 = sbr.rel (%p263) target = $region44
        $region43: #{tpu_custom_call.1} parent=35 // pred_region
          %p266 = scmp.lt.s32.totalorder %s24, 1
          %s267 = scalar_select %p266, %s24, 1
          %p268 = scmp.lt.s32.totalorder %s25, 1
          %s269 = scalar_select %p268, %s25, 1
          %s270 = smul.addr %s267, 2
          %s271 = sadd.s32 %s269, %s270
          %s272 = smul.addr %s271, 4
          %s273 = scalar_lea.vmem %s1, %s272
        $region44: #{tpu_custom_call.1} parent=35 // pred_fallthru
          _
      $region36: #{tpu_custom_call.1} parent=5 // pred_fallthru
        _
      %p274 = scmp.le.s32.totalorder 1, %s17
      %p275 = scmp.lt.s32.totalorder %s17, 5
      %p276 = pnand %p274, %p275
      %p277 = pneg %p276
      // Predicated region
      $region45: #{tpu_custom_call.1} parent=5 // pred_check
        _
      $region46: #{tpu_custom_call.1} parent=5 // pred_check_branch
        %279 = sbr.rel (%p276) target = $region48
      $region47: #{tpu_custom_call.1} parent=5 // pred_region
        %s280 = ssub.s32 %s17, 1
        %p281 = scmp.lt.s32.totalorder %s26, 1
        %s282 = scalar_select %p281, %s26, 1
        %p283 = scmp.lt.s32.totalorder %s27, 1
        %s284 = scalar_select %p283, %s27, 1
        %s285 = smul.addr %s282, 2
        %s286 = sadd.s32 %s284, %s285
        %s287 = smul.addr %s286, 4
        %s288 = scalar_lea.vmem %s0, %s287
        %p289 = pneg %p57
        %p290 = pneg %p54
        %p291 = scmp.lt.s32.totalorder %s26, 1
        %s292 = scalar_select %p291, %s26, 1
        %p293 = scmp.lt.s32.totalorder %s27, 1
        %s294 = scalar_select %p293, %s27, 1
        %s295 = smul.addr %s292, 2
        %s296 = sadd.s32 %s294, %s295
        %s297 = smul.addr %s296, 4
        %s298 = scalar_lea.vmem %s1, %s297
        %p299 = pneg %p85
        %p300 = pneg %p82
        %p301 = pneg %p106
        %p302 = pneg %p103
        %p303 = pneg %p127
        %p304 = pneg %p124
        %p305 = pneg %p148
        %p306 = pneg %p145
        %p307 = pneg %p169
        %p308 = pneg %p166
        %p309 = pneg %p190
        %p310 = pneg %p187
        %p311 = pneg %p218
        %p312 = pneg %p215
        %s313 = sand.u32 %s205, 1
        %s314 = scalar_lea.sflag [#allocation4], %s313
        %s315 = sand.u32 %s205, 1
        %s316 = smul.addr %s315, 4
        %s317 = scalar_lea.vmem [#allocation3], %s316
        %p318 = scmp.lt.s32.totalorder %s26, 1
        %s319 = scalar_select %p318, %s26, 1
        %p320 = scmp.lt.s32.totalorder %s27, 1
        %s321 = scalar_select %p320, %s27, 1
        %s322 = smul.addr %s319, 2
        %s323 = sadd.s32 %s321, %s322
        %s324 = smul.addr %s323, 4
        %s325 = scalar_lea.vmem %s0, %s324
        %p326 = scmp.lt.s32.totalorder %s26, 1
        %s327 = scalar_select %p326, %s26, 1
        %p328 = scmp.lt.s32.totalorder %s27, 1
        %s329 = scalar_select %p328, %s27, 1
        %s330 = smul.addr %s327, 2
        %s331 = sadd.s32 %s329, %s330
        %s332 = smul.addr %s331, 4
        %s333 = scalar_lea.vmem %s1, %s332
        %v334 = vld [vmem:[%s2] sm:$0xff]
        %v335 = vld [vmem:[%s325] sm:$0xf]
        %v336 = vld [vmem:[%s3] sm:$0xff]
        %v337 = vld [vmem:[%s333] sm:$0xf]
        %vm338 = vcmask 31744
        %v340 = vsel %vm338, %v336, 0
        %vm342 = vcmask 1043456
        %v344 = vsel %vm342, %v337, 0
        %346 = vmatprep.subr.mxu0 0.0
        %347 = vmatpush1.msra.mxu0 %v344
        %348 = vmatprep.subr.mxu0 0.0
        %349 = vmatpush1.msra.mxu0 0.0
        %350 = vmatprep.subr.mxu0 0.0
        %351 = vmatpush1.msra.mxu0 0.0
        %352 = vmatprep.subr.mxu0 0.0
        %353 = vmatpush1.msra.mxu0 0.0
        %354 = vmatprep.subr.mxu0 0.0
        %355 = vmatpush1.msra.mxu0 0.0
        %356 = vmatprep.subr.mxu0 0.0
        %357 = vmatpush1.msra.mxu0 0.0
        %358 = vmatprep.subr.mxu0 0.0
        %359 = vmatpush1.msra.mxu0 0.0
        %360 = vmatprep.subr.mxu0 0.0
        %361 = vmatpush1.msra.mxu0 0.0
        %362 = vmatprep.subr.mxu0 0.0
        %363 = vmatpush1.msra.mxu0 0.0
        %364 = vmatprep.subr.mxu0 0.0
        %365 = vmatpush1.msra.mxu0 0.0
        %366 = vmatprep.subr.mxu0 0.0
        %367 = vmatpush1.msra.mxu0 0.0
        %368 = vmatprep.subr.mxu0 0.0
        %369 = vmatpush1.msra.mxu0 0.0
        %370 = vmatprep.subr.mxu0 0.0
        %371 = vmatpush1.msra.mxu0 0.0
        %372 = vmatprep.subr.mxu0 0.0
        %373 = vmatpush1.msra.mxu0 0.0
        %374 = vmatprep.subr.mxu0 0.0
        %375 = vmatpush1.msra.mxu0 0.0
        %376 = vmatprep.subr.mxu0 0.0
        %377 = vmatpush1.msra.mxu0 0.0
        %378 = vmatprep.subr.mxu0 0.0
        %379 = vmatpush1.msra.mxu0 0.0
        %380 = vmatprep.subr.mxu0 0.0
        %381 = vmatpush1.msra.mxu0 0.0
        %382 = vmatprep.subr.mxu0 0.0
        %383 = vmatpush1.msra.mxu0 0.0
        %384 = vmatprep.subr.mxu0 0.0
        %385 = vmatpush1.msra.mxu0 0.0
        %386 = vmatprep.subr.mxu0 0.0
        %387 = vmatpush1.msra.mxu0 0.0
        %388 = vmatprep.subr.mxu0 0.0
        %389 = vmatpush1.msra.mxu0 0.0
        %390 = vmatprep.subr.mxu0 0.0
        %391 = vmatpush1.msra.mxu0 0.0
        %392 = vmatprep.subr.mxu0 0.0
        %393 = vmatpush1.msra.mxu0 0.0
        %394 = vmatprep.subr.mxu0 0.0
        %395 = vmatpush1.msra.mxu0 0.0
        %396 = vmatprep.subr.mxu0 0.0
        %397 = vmatpush1.msra.mxu0 0.0
        %398 = vmatprep.subr.mxu0 0.0
        %399 = vmatpush1.msra.mxu0 0.0
        %400 = vmatprep.subr.mxu0 0.0
        %401 = vmatpush1.msra.mxu0 0.0
        %402 = vmatprep.subr.mxu0 0.0
        %403 = vmatpush1.msra.mxu0 0.0
        %404 = vmatprep.subr.mxu0 0.0
        %405 = vmatpush1.msra.mxu0 0.0
        %406 = vmatprep.subr.mxu0 0.0
        %407 = vmatpush1.msra.mxu0 0.0
        %408 = vmatprep.subr.mxu0 0.0
        %409 = vmatpush1.msra.mxu0 0.0
        %410 = vmatprep.mubr.f32.mxu0 0.0
        %411 = vmatmul.mubr.f32.gmra.mrb[0].mxu0 %v340
        %v412 = vpop.f32.mrb[0].mxu0
        %v413 = vadd.f32 0.0, %v412
        %v414 = vpop.f32.mrb[0].mxu0
        %415 = vdwg.mxu0
        %v417 = vsel %vm338, %v334, 0
        %v420 = vsel %vm342, %v335, 0
        %422 = vmatprep.subr.mxu0 0.0
        %423 = vmatpush1.msra.mxu0 %v420
        %424 = vmatprep.subr.mxu0 0.0
        %425 = vmatpush1.msra.mxu0 0.0
        %426 = vmatprep.subr.mxu0 0.0
        %427 = vmatpush1.msra.mxu0 0.0
        %428 = vmatprep.subr.mxu0 0.0
        %429 = vmatpush1.msra.mxu0 0.0
        %430 = vmatprep.subr.mxu0 0.0
        %431 = vmatpush1.msra.mxu0 0.0
        %432 = vmatprep.subr.mxu0 0.0
        %433 = vmatpush1.msra.mxu0 0.0
        %434 = vmatprep.subr.mxu0 0.0
        %435 = vmatpush1.msra.mxu0 0.0
        %436 = vmatprep.subr.mxu0 0.0
        %437 = vmatpush1.msra.mxu0 0.0
        %438 = vmatprep.subr.mxu0 0.0
        %439 = vmatpush1.msra.mxu0 0.0
        %440 = vmatprep.subr.mxu0 0.0
        %441 = vmatpush1.msra.mxu0 0.0
        %442 = vmatprep.subr.mxu0 0.0
        %443 = vmatpush1.msra.mxu0 0.0
        %444 = vmatprep.subr.mxu0 0.0
        %445 = vmatpush1.msra.mxu0 0.0
        %446 = vmatprep.subr.mxu0 0.0
        %447 = vmatpush1.msra.mxu0 0.0
        %448 = vmatprep.subr.mxu0 0.0
        %449 = vmatpush1.msra.mxu0 0.0
        %450 = vmatprep.subr.mxu0 0.0
        %451 = vmatpush1.msra.mxu0 0.0
        %452 = vmatprep.subr.mxu0 0.0
        %453 = vmatpush1.msra.mxu0 0.0
        %454 = vmatprep.subr.mxu0 0.0
        %455 = vmatpush1.msra.mxu0 0.0
        %456 = vmatprep.subr.mxu0 0.0
        %457 = vmatpush1.msra.mxu0 0.0
        %458 = vmatprep.subr.mxu0 0.0
        %459 = vmatpush1.msra.mxu0 0.0
        %460 = vmatprep.subr.mxu0 0.0
        %461 = vmatpush1.msra.mxu0 0.0
        %462 = vmatprep.subr.mxu0 0.0
        %463 = vmatpush1.msra.mxu0 0.0
        %464 = vmatprep.subr.mxu0 0.0
        %465 = vmatpush1.msra.mxu0 0.0
        %466 = vmatprep.subr.mxu0 0.0
        %467 = vmatpush1.msra.mxu0 0.0
        %468 = vmatprep.subr.mxu0 0.0
        %469 = vmatpush1.msra.mxu0 0.0
        %470 = vmatprep.subr.mxu0 0.0
        %471 = vmatpush1.msra.mxu0 0.0
        %472 = vmatprep.subr.mxu0 0.0
        %473 = vmatpush1.msra.mxu0 0.0
        %474 = vmatprep.subr.mxu0 0.0
        %475 = vmatpush1.msra.mxu0 0.0
        %476 = vmatprep.subr.mxu0 0.0
        %477 = vmatpush1.msra.mxu0 0.0
        %478 = vmatprep.subr.mxu0 0.0
        %479 = vmatpush1.msra.mxu0 0.0
        %480 = vmatprep.subr.mxu0 0.0
        %481 = vmatpush1.msra.mxu0 0.0
        %482 = vmatprep.subr.mxu0 0.0
        %483 = vmatpush1.msra.mxu0 0.0
        %484 = vmatprep.subr.mxu0 0.0
        %485 = vmatpush1.msra.mxu0 0.0
        %486 = vmatprep.mubr.f32.mxu0 0.0
        %487 = vmatmul.mubr.f32.gmra.mrb[0].mxu0 %v417
        %v488 = vpop.f32.mrb[0].mxu0
        %v489 = vadd.f32 %v413, %v488
        %v490 = vpop.f32.mrb[0].mxu0
        %491 = vdwg.mxu0
        %v492 = vld [vmem:[%s4] sm:$0xff]
        %494 = vset.pattern.permute.xlu0 0
        %495 = vperm.xlu0 %494, %v492
        %v496 = vpop.permute.xlu0 %495
        %v498 = vadd.f32 %v489, %v496
        %v499 = vmax.f32 %v498, 0.0
        %v500 = vld [vmem:[%s5] sm:$0x1]
        %s501 = sld [smem:[#allocation2]]
        %v502 = vstv %s501
        %vm503 = vcmask 64512
        %v505 = vsel %vm503, %v500, 0
        %507 = vmatprep.subr.mxu0 0.0
        %508 = vmatpush1.msra.mxu0 %v499
        %509 = vmatprep.subr.mxu0 0.0
        %510 = vmatpush1.msra.mxu0 0.0
        %511 = vmatprep.subr.mxu0 0.0
        %512 = vmatpush1.msra.mxu0 0.0
        %513 = vmatprep.subr.mxu0 0.0
        %514 = vmatpush1.msra.mxu0 0.0
        %515 = vmatprep.subr.mxu0 0.0
        %516 = vmatpush1.msra.mxu0 0.0
        %517 = vmatprep.subr.mxu0 0.0
        %518 = vmatpush1.msra.mxu0 0.0
        %519 = vmatprep.subr.mxu0 0.0
        %520 = vmatpush1.msra.mxu0 0.0
        %521 = vmatprep.subr.mxu0 0.0
        %522 = vmatpush1.msra.mxu0 0.0
        %523 = vmatprep.subr.mxu0 0.0
        %524 = vmatpush1.msra.mxu0 0.0
        %525 = vmatprep.subr.mxu0 0.0
        %526 = vmatpush1.msra.mxu0 0.0
        %527 = vmatprep.subr.mxu0 0.0
        %528 = vmatpush1.msra.mxu0 0.0
        %529 = vmatprep.subr.mxu0 0.0
        %530 = vmatpush1.msra.mxu0 0.0
        %531 = vmatprep.subr.mxu0 0.0
        %532 = vmatpush1.msra.mxu0 0.0
        %533 = vmatprep.subr.mxu0 0.0
        %534 = vmatpush1.msra.mxu0 0.0
        %535 = vmatprep.subr.mxu0 0.0
        %536 = vmatpush1.msra.mxu0 0.0
        %537 = vmatprep.subr.mxu0 0.0
        %538 = vmatpush1.msra.mxu0 0.0
        %539 = vmatprep.subr.mxu0 0.0
        %540 = vmatpush1.msra.mxu0 0.0
        %541 = vmatprep.subr.mxu0 0.0
        %542 = vmatpush1.msra.mxu0 0.0
        %543 = vmatprep.subr.mxu0 0.0
        %544 = vmatpush1.msra.mxu0 0.0
        %545 = vmatprep.subr.mxu0 0.0
        %546 = vmatpush1.msra.mxu0 0.0
        %547 = vmatprep.subr.mxu0 0.0
        %548 = vmatpush1.msra.mxu0 0.0
        %549 = vmatprep.subr.mxu0 0.0
        %550 = vmatpush1.msra.mxu0 0.0
        %551 = vmatprep.subr.mxu0 0.0
        %552 = vmatpush1.msra.mxu0 0.0
        %553 = vmatprep.subr.mxu0 0.0
        %554 = vmatpush1.msra.mxu0 0.0
        %555 = vmatprep.subr.mxu0 0.0
        %556 = vmatpush1.msra.mxu0 0.0
        %557 = vmatprep.subr.mxu0 0.0
        %558 = vmatpush1.msra.mxu0 0.0
        %559 = vmatprep.subr.mxu0 0.0
        %560 = vmatpush1.msra.mxu0 0.0
        %561 = vmatprep.subr.mxu0 0.0
        %562 = vmatpush1.msra.mxu0 0.0
        %563 = vmatprep.subr.mxu0 0.0
        %564 = vmatpush1.msra.mxu0 0.0
        %565 = vmatprep.subr.mxu0 0.0
        %566 = vmatpush1.msra.mxu0 0.0
        %567 = vmatprep.subr.mxu0 0.0
        %568 = vmatpush1.msra.mxu0 0.0
        %569 = vmatprep.subr.mxu0 0.0
        %570 = vmatpush1.msra.mxu0 0.0
        %571 = vmatprep.mubr.f32.mxu0 0.0
        %572 = vmatmul.mubr.f32.gmra.mrb[0].mxu0 %v505
        %v573 = vpop.f32.mrb[0].mxu0
        %v574 = vadd.f32 %v502, %v573
        %v575 = vpop.f32.mrb[0].mxu0
        %576 = vdwg.mxu0
        %v577 = vxor.u32 %v574, 2147483648
        %v578 = vmul.f32 %v577, 1.442695
        %v579 = vpow.pop %v578
        %v580 = vadd.f32 %v579, 1.0
        %v581 = vrcp.pop %v580
        %v582 = vmul.f32 1.0, %v581
        %v583 = vlaneseq
        %v584 = vshrl.u32 %v583, 7
        %v585 = vsub.s32 0, %v584
        %v586 = vrot.slane %v582, %v585
        %v587 = vmul.f32 %v337, %v586
        %588 = vst [vmem:[%s317] sm:$0xf] %v587
        %s589 = sand.u32 %s205, 1
        %s590 = scalar_lea.sflag [#allocation4], %s589
        %s591 = sand.u32 %s205, 1
        %s592 = smul.addr %s591, 4
        %s593 = scalar_lea.vmem [#allocation3], %s592
        // Predicated region
        $region49: #{tpu_custom_call.1} parent=47 // pred_check
          %p594 = pneg %p215
        $region50: #{tpu_custom_call.1} parent=47 // pred_check_branch
          %596 = sbr.rel (%p594) target = $region52
        $region51: #{tpu_custom_call.1} parent=47 // pred_region
          %s598 = ssub.s32 64, 64
          %599 = vsyncadd %s590, %s598
          %s600 = smul.addr %s26, 2
          %s601 = sadd.s32 %s27, %s600
          %s602 = smul.addr %s601, 64
          %s603 = scalar_lea.hbm %s7, %s602
          %s605 = sshll.u32 %s593, 4
          %s606 = int_to_ptr.vmem [resolvable:$true] %s605
          %608 = dma.vmem_to_hbm [thread:$0]  %s606, 64, %s603, %s590
        $region52: #{tpu_custom_call.1} parent=47 // pred_fallthru
          _
      $region48: #{tpu_custom_call.1} parent=5 // pred_fallthru
        _
      %p609 = scmp.le.s32.totalorder 2, %s17
      // Predicated region
      $region53: #{tpu_custom_call.1} parent=5 // pred_check
        %p610 = pneg %p609
      $region54: #{tpu_custom_call.1} parent=5 // pred_check_branch
        %612 = sbr.rel (%p610) target = $region56
      $region55: #{tpu_custom_call.1} parent=5 // pred_region
        %s613 = ssub.s32 %s17, 2
        // Predicated region
        $region57: #{tpu_custom_call.1} parent=55 // pred_check
          %p614 = pneg %p221
        $region58: #{tpu_custom_call.1} parent=55 // pred_check_branch
          %616 = sbr.rel (%p614) target = $region60
        $region59: #{tpu_custom_call.1} parent=55 // pred_region
          %s617 = sand.u32 %s206, 1
          %s618 = scalar_lea.sflag [#allocation4], %s617
          %s619 = sand.u32 %s206, 1
          %s620 = smul.addr %s619, 4
          %s621 = scalar_lea.vmem [#allocation3], %s620
          %622 = dma.done %s618, 64
        $region60: #{tpu_custom_call.1} parent=55 // pred_fallthru
          _
      $region56: #{tpu_custom_call.1} parent=5 // pred_fallthru
        _
    $region6: #{tpu_custom_call.1} parent=1 // loop_footer
      %s21 = sadd.s32 1, %s17
    $region7: #{tpu_custom_call.1} parent=1 // loop_footer_branch
      %16 = sbr.rel target = $region3
    $region8: #{tpu_custom_call.1} parent=1 // loop_exit
      _
    %623 = vsyncpa [#allocation4], 1
    %s624 = scalar_lea.sflag [#allocation4], 1
    %625 = vsyncpa %s624, 1

</llo_original>
